<compile_context>
chip_gen: v5e
topology: v5e:2x2
jax: 0.10.0
libtpu: 0.0.40
codegen_flags: <defaults>
</compile_context>

<pallas_src>
import jax
import jax.numpy as jnp
import numpy as np
from jax.experimental import pallas as pl
from jax.experimental.pallas import tpu as pltpu


# ---------------------------------------------------------------------------
# Pallas kernel
# ---------------------------------------------------------------------------
def _make_tcn_kernel(num_layers, seg_len, rows):
    """rows = B * seg_len; activations are (rows, C): time on sublanes, channels on lanes."""

    def kernel(x_ref, pos_ref, w_ref, b_ref, wo_ref, bo_ref, o_ref):
        f = x_ref[...]                       # (B*T, C) float32
        pos = pos_ref[...]                   # (B*T, 1) int32: time index within each sequence

        def shift_back(x, d):
            # y[b, t] = x[b, t - d]  (zero padded at t < d).  roll is modular over the
            # merged B*T rows; the mask zeroes rows that crossed a sequence boundary.
            y = pltpu.roll(x, shift=d % rows, axis=0)
            return jnp.where(pos >= d, y, 0.0)

        def shift_fwd(x, d):
            # y[b, t] = x[b, t + d]  (zero padded at t >= T - d).
            y = pltpu.roll(x, shift=(-d) % rows, axis=0)
            return jnp.where(pos < seg_len - d, y, 0.0)

        for i in range(num_layers):
            d1 = 2 ** (num_layers - 1 - i)
            d2 = 2 ** i
            w = w_ref[i]                     # (5, C, C) folded tap weights (fusion pre-applied)
            fused = (jnp.dot(shift_back(f, d1), w[0], preferred_element_type=jnp.float32)
                     + jnp.dot(shift_fwd(f, d1), w[1], preferred_element_type=jnp.float32)
                     + jnp.dot(shift_back(f, d2), w[2], preferred_element_type=jnp.float32)
                     + jnp.dot(shift_fwd(f, d2), w[3], preferred_element_type=jnp.float32)
                     + jnp.dot(f, w[4], preferred_element_type=jnp.float32)
                     + b_ref[i])             # (1, C) merged bias
            f = jnp.maximum(fused, 0.0) + f  # relu, dropout(identity), residual

        # conv_1x1_out
        o_ref[...] = jnp.dot(f, wo_ref[...], preferred_element_type=jnp.float32) + bo_ref[...]

    return kernel


# ---------------------------------------------------------------------------
# Host-side parameter folding (torch layout -> kernel layout)
# ---------------------------------------------------------------------------
def fold_params(w1_t, b1_t, w2_t, b2_t, wf_t, bf_t, wo_t, bo_t):
    """Fold conv_fusion (1x1 over concat) into the dilated-conv taps.

    torch layouts: Conv1d weight (Cout, Cin, K), bias (Cout,).
    Returns kernel-layout params for rows @ (Cin, Cout) matmuls:
      W5: (L, 5, C, C), tap order = [x[t-d1], x[t+d1], x[t-d2], x[t+d2], x[t]]
      BM: (L, 1, C) merged bias;  WO: (C, Cout);  BO: (1, Cout)
    """
    w1 = np.asarray(w1_t, np.float32); b1 = np.asarray(b1_t, np.float32)
    w2 = np.asarray(w2_t, np.float32); b2 = np.asarray(b2_t, np.float32)
    wf = np.asarray(wf_t, np.float32); bf = np.asarray(bf_t, np.float32)
    wo = np.asarray(wo_t, np.float32); bo = np.asarray(bo_t, np.float32)

    L, C = w1.shape[0], w1.shape[1]
    WF1 = np.transpose(wf[:, :, :C, 0], (0, 2, 1))     # (L, C, C): [l, c, co] = wf[l, co, c]
    WF2 = np.transpose(wf[:, :, C:, 0], (0, 2, 1))
    T1 = np.transpose(w1, (0, 3, 2, 1))                # (L, K, Cin, C)
    T2 = np.transpose(w2, (0, 3, 2, 1))

    mm = lambda a, b: np.einsum('lic,lco->lio', a, b)
    W5 = np.stack([mm(T1[:, 0], WF1),                  # x[t - d1]
                   mm(T1[:, 2], WF1),                  # x[t + d1]
                   mm(T2[:, 0], WF2),                  # x[t - d2]
                   mm(T2[:, 2], WF2),                  # x[t + d2]
                   mm(T1[:, 1], WF1) + mm(T2[:, 1], WF2)],  # center tap
                  axis=1)                              # (L, 5, C, C)
    BM = (np.einsum('lc,lco->lo', b1, WF1)
          + np.einsum('lc,lco->lo', b2, WF2) + bf)[:, None, :]   # (L, 1, C)
    WO = np.transpose(wo[:, :, 0])                     # (C, Cout)
    BO = bo.reshape(1, -1)                             # (1, Cout)
    return (jnp.asarray(W5), jnp.asarray(BM), jnp.asarray(WO), jnp.asarray(BO))


# ---------------------------------------------------------------------------
# Wrapper
# ---------------------------------------------------------------------------
def dilated_tcn(x_nct, w5, bm, wo, bo, num_layers):
    """x_nct: (B, C, T) float32 (torch NCT). Returns (B, C_out, T)."""
    B, C, T = x_nct.shape
    Cout = wo.shape[1]
    R = B * T

    # (B, C, T) -> (B*T, C): time on sublanes, channels on lanes
    x_rows = jnp.transpose(x_nct, (0, 2, 1)).reshape(R, C).astype(jnp.float32)
    # per-row time index within its own sequence (for shift masking)
    pos = jnp.tile(jnp.arange(T, dtype=jnp.int32), B).reshape(R, 1)

    y_rows = pl.pallas_call(
        _make_tcn_kernel(num_layers, T, R),
        out_shape=jax.ShapeDtypeStruct((R, Cout), jnp.float32),
    )(x_rows, pos, w5, bm, wo, bo)

    # back to torch NCT layout
    return jnp.transpose(y_rows.reshape(B, T, Cout), (0, 2, 1))


# ---------------------------------------------------------------------------
# Pure-JAX reference (torch NCT semantics) for verification
# ---------------------------------------------------------------------------
def _conv1d_ref(x_ct, w, b, dilation, padding):
    # x_ct: (Cin, T); w: (Cout, Cin, K) torch layout; stride 1
    _, T = x_ct.shape
    K = w.shape[2]
    xp = jnp.pad(x_ct, ((0, 0), (padding, padding)))
    Tout = T + 2 * padding - dilation * (K - 1)
    out = b[:, None]
    for k in range(K):
        out = out + jnp.dot(w[:, :, k], xp[:, k * dilation:k * dilation + Tout])
    return out


def reference(x_nct, w1, b1, w2, b2, wf, bf, wo, bo, L):
    outs = []
    for n in range(x_nct.shape[0]):
        f = x_nct[n]
        for i in range(L):
            f_in = f
            d1 = 2 ** (L - 1 - i)
            d2 = 2 ** i
            o1 = _conv1d_ref(f, w1[i], b1[i], d1, d1)
            o2 = _conv1d_ref(f, w2[i], b2[i], d2, d2)
            cat = jnp.concatenate([o1, o2], axis=0)
            f = _conv1d_ref(cat, wf[i], bf[i], 1, 0)
            f = jnp.maximum(f, 0.0) + f_in
        f = _conv1d_ref(f, wo, bo, 1, 0)
        outs.append(f)
    return jnp.stack(outs)


# ---------------------------------------------------------------------------
if __name__ == "__main__":
    # _DilatedTCN(num_layers, input_dim, output_dim), small shapes
    num_layers, input_dim, output_dim = 3, 8, 16
    B, T = 2, 16
    L, C = num_layers, input_dim

    key = jax.random.PRNGKey(0)
    keys = jax.random.split(key, 10)
    s = 0.1
    # Parameters in torch layout (Conv1d: (Cout, Cin, K))
    w1_t = jax.random.normal(keys[0], (L, C, C, 3), dtype=jnp.float32) * s
    b1_t = jax.random.normal(keys[1], (L, C), dtype=jnp.float32) * s
    w2_t = jax.random.normal(keys[2], (L, C, C, 3), dtype=jnp.float32) * s
    b2_t = jax.random.normal(keys[3], (L, C), dtype=jnp.float32) * s
    wf_t = jax.random.normal(keys[4], (L, C, 2 * C, 1), dtype=jnp.float32) * s
    bf_t = jax.random.normal(keys[5], (L, C), dtype=jnp.float32) * s
    wo_t = jax.random.normal(keys[6], (output_dim, C, 1), dtype=jnp.float32) * s
    bo_t = jax.random.normal(keys[7], (output_dim,), dtype=jnp.float32) * s

    # Input in PyTorch NCT layout
    x = jax.random.normal(keys[8], (B, C, T), dtype=jnp.float32)

    W5, BM, WO, BO = fold_params(w1_t, b1_t, w2_t, b2_t, wf_t, bf_t, wo_t, bo_t)

    out = dilated_tcn(x, W5, BM, WO, BO, num_layers)
    out = jax.block_until_ready(out)

    ref = reference(x, w1_t, b1_t, w2_t, b2_t, wf_t, bf_t, wo_t, bo_t, L)
    ref = jax.block_until_ready(ref)

    assert out.shape == (B, output_dim, T), out.shape
    np.testing.assert_allclose(np.asarray(out), np.asarray(ref),
                               rtol=1e-4, atol=1e-4)
    print("KERNEL_OK")
</pallas_src>

<mosaic_0001>
module attributes {stable_mosaic.version = 11 : i64} {
  func.func @kernel(%arg0: memref<32x8xf32, #tpu.memory_space<vmem>>, %arg1: memref<32x1xi32, #tpu.memory_space<vmem>>, %arg2: memref<3x5x8x8xf32, #tpu.memory_space<vmem>>, %arg3: memref<3x1x8xf32, #tpu.memory_space<vmem>>, %arg4: memref<8x16xf32, #tpu.memory_space<vmem>>, %arg5: memref<1x16xf32, #tpu.memory_space<vmem>>, %arg6: memref<32x16xf32, #tpu.memory_space<vmem>>) attributes {dimension_semantics = [], scalar_prefetch = 0 : i64, scratch_operands = 0 : i64, tpu.core_type = #tpu.core_type<tc>} {
    %c0 = arith.constant 0 : index
    %c0_0 = arith.constant 0 : index
    %0 = vector.load %arg0[%c0, %c0_0] : memref<32x8xf32, #tpu.memory_space<vmem>>, vector<32x8xf32>
    %c0_1 = arith.constant 0 : index
    %c0_2 = arith.constant 0 : index
    %1 = vector.load %arg1[%c0_1, %c0_2] : memref<32x1xi32, #tpu.memory_space<vmem>>, vector<32x1xi32>
    %c0_3 = arith.constant 0 : index
    %c0_4 = arith.constant 0 : index
    %c0_5 = arith.constant 0 : index
    %c0_6 = arith.constant 0 : index
    %2 = vector.load %arg2[%c0_3, %c0_4, %c0_5, %c0_6] : memref<3x5x8x8xf32, #tpu.memory_space<vmem>>, vector<1x5x8x8xf32>
    %3 = vector.shape_cast %2 : vector<1x5x8x8xf32> to vector<5x8x8xf32>
    %c4_i32 = arith.constant 4 : i32
    %4 = tpu.dynamic_rotate %0 by %c4_i32 dim 0 : vector<32x8xf32>, i32 -> vector<32x8xf32>
    %c4_i32_7 = arith.constant 4 : i32
    %5 = vector.broadcast %c4_i32_7 : i32 to vector<32x1xi32>
    %6 = arith.cmpi sge, %1, %5 : vector<32x1xi32>
    %cst = arith.constant 0.000000e+00 : f32
    %7 = vector.shape_cast %6 : vector<32x1xi1> to vector<32x1xi1>
    %8 = vector.broadcast %7 : vector<32x1xi1> to vector<32x8xi1>
    %9 = vector.broadcast %cst : f32 to vector<32x8xf32>
    %10 = arith.select %8, %4, %9 : vector<32x8xi1>, vector<32x8xf32>
    %11 = vector.extract_strided_slice %3 {offsets = [0, 0, 0], sizes = [1, 8, 8], strides = [1, 1, 1]} : vector<5x8x8xf32> to vector<1x8x8xf32>
    %12 = vector.shape_cast %11 : vector<1x8x8xf32> to vector<8x8xf32>
    %cst_8 = arith.constant dense<0.000000e+00> : vector<32x8xf32>
    %13 = tpu.matmul %10, %12, %cst_8 {dimension_numbers = #tpu.dot_dimension_numbers<[1], [0], [0], [1], [0, 0, 1, 1], [], []>} : vector<32x8xf32>, vector<8x8xf32>, vector<32x8xf32> -> vector<32x8xf32>
    %c28_i32 = arith.constant 28 : i32
    %14 = tpu.dynamic_rotate %0 by %c28_i32 dim 0 : vector<32x8xf32>, i32 -> vector<32x8xf32>
    %c12_i32 = arith.constant 12 : i32
    %15 = vector.broadcast %c12_i32 : i32 to vector<32x1xi32>
    %16 = arith.cmpi slt, %1, %15 : vector<32x1xi32>
    %cst_9 = arith.constant 0.000000e+00 : f32
    %17 = vector.shape_cast %16 : vector<32x1xi1> to vector<32x1xi1>
    %18 = vector.broadcast %17 : vector<32x1xi1> to vector<32x8xi1>
    %19 = vector.broadcast %cst_9 : f32 to vector<32x8xf32>
    %20 = arith.select %18, %14, %19 : vector<32x8xi1>, vector<32x8xf32>
    %21 = vector.extract_strided_slice %3 {offsets = [1, 0, 0], sizes = [1, 8, 8], strides = [1, 1, 1]} : vector<5x8x8xf32> to vector<1x8x8xf32>
    %22 = vector.shape_cast %21 : vector<1x8x8xf32> to vector<8x8xf32>
    %cst_10 = arith.constant dense<0.000000e+00> : vector<32x8xf32>
    %23 = tpu.matmul %20, %22, %cst_10 {dimension_numbers = #tpu.dot_dimension_numbers<[1], [0], [0], [1], [0, 0, 1, 1], [], []>} : vector<32x8xf32>, vector<8x8xf32>, vector<32x8xf32> -> vector<32x8xf32>
    %24 = arith.addf %13, %23 : vector<32x8xf32>
    %c1_i32 = arith.constant 1 : i32
    %25 = tpu.dynamic_rotate %0 by %c1_i32 dim 0 : vector<32x8xf32>, i32 -> vector<32x8xf32>
    %c1_i32_11 = arith.constant 1 : i32
    %26 = vector.broadcast %c1_i32_11 : i32 to vector<32x1xi32>
    %27 = arith.cmpi sge, %1, %26 : vector<32x1xi32>
    %cst_12 = arith.constant 0.000000e+00 : f32
    %28 = vector.shape_cast %27 : vector<32x1xi1> to vector<32x1xi1>
    %29 = vector.broadcast %28 : vector<32x1xi1> to vector<32x8xi1>
    %30 = vector.broadcast %cst_12 : f32 to vector<32x8xf32>
    %31 = arith.select %29, %25, %30 : vector<32x8xi1>, vector<32x8xf32>
    %32 = vector.extract_strided_slice %3 {offsets = [2, 0, 0], sizes = [1, 8, 8], strides = [1, 1, 1]} : vector<5x8x8xf32> to vector<1x8x8xf32>
    %33 = vector.shape_cast %32 : vector<1x8x8xf32> to vector<8x8xf32>
    %cst_13 = arith.constant dense<0.000000e+00> : vector<32x8xf32>
    %34 = tpu.matmul %31, %33, %cst_13 {dimension_numbers = #tpu.dot_dimension_numbers<[1], [0], [0], [1], [0, 0, 1, 1], [], []>} : vector<32x8xf32>, vector<8x8xf32>, vector<32x8xf32> -> vector<32x8xf32>
    %35 = arith.addf %24, %34 : vector<32x8xf32>
    %c31_i32 = arith.constant 31 : i32
    %36 = tpu.dynamic_rotate %0 by %c31_i32 dim 0 : vector<32x8xf32>, i32 -> vector<32x8xf32>
    %c15_i32 = arith.constant 15 : i32
    %37 = vector.broadcast %c15_i32 : i32 to vector<32x1xi32>
    %38 = arith.cmpi slt, %1, %37 : vector<32x1xi32>
    %cst_14 = arith.constant 0.000000e+00 : f32
    %39 = vector.shape_cast %38 : vector<32x1xi1> to vector<32x1xi1>
    %40 = vector.broadcast %39 : vector<32x1xi1> to vector<32x8xi1>
    %41 = vector.broadcast %cst_14 : f32 to vector<32x8xf32>
    %42 = arith.select %40, %36, %41 : vector<32x8xi1>, vector<32x8xf32>
    %43 = vector.extract_strided_slice %3 {offsets = [3, 0, 0], sizes = [1, 8, 8], strides = [1, 1, 1]} : vector<5x8x8xf32> to vector<1x8x8xf32>
    %44 = vector.shape_cast %43 : vector<1x8x8xf32> to vector<8x8xf32>
    %cst_15 = arith.constant dense<0.000000e+00> : vector<32x8xf32>
    %45 = tpu.matmul %42, %44, %cst_15 {dimension_numbers = #tpu.dot_dimension_numbers<[1], [0], [0], [1], [0, 0, 1, 1], [], []>} : vector<32x8xf32>, vector<8x8xf32>, vector<32x8xf32> -> vector<32x8xf32>
    %46 = arith.addf %35, %45 : vector<32x8xf32>
    %47 = vector.extract_strided_slice %3 {offsets = [4, 0, 0], sizes = [1, 8, 8], strides = [1, 1, 1]} : vector<5x8x8xf32> to vector<1x8x8xf32>
    %48 = vector.shape_cast %47 : vector<1x8x8xf32> to vector<8x8xf32>
    %cst_16 = arith.constant dense<0.000000e+00> : vector<32x8xf32>
    %49 = tpu.matmul %0, %48, %cst_16 {dimension_numbers = #tpu.dot_dimension_numbers<[1], [0], [0], [1], [0, 0, 1, 1], [], []>} : vector<32x8xf32>, vector<8x8xf32>, vector<32x8xf32> -> vector<32x8xf32>
    %50 = arith.addf %46, %49 : vector<32x8xf32>
    %c0_17 = arith.constant 0 : index
    %c0_18 = arith.constant 0 : index
    %c0_19 = arith.constant 0 : index
    %51 = vector.load %arg3[%c0_17, %c0_18, %c0_19] : memref<3x1x8xf32, #tpu.memory_space<vmem>>, vector<1x1x8xf32>
    %52 = vector.shape_cast %51 : vector<1x1x8xf32> to vector<1x8xf32>
    %53 = vector.broadcast %52 : vector<1x8xf32> to vector<32x8xf32>
    %54 = arith.addf %50, %53 : vector<32x8xf32>
    %cst_20 = arith.constant 0.000000e+00 : f32
    %55 = vector.broadcast %cst_20 : f32 to vector<32x8xf32>
    %56 = arith.maximumf %54, %55 : vector<32x8xf32>
    %57 = arith.addf %56, %0 : vector<32x8xf32>
    %c1 = arith.constant 1 : index
    %c0_21 = arith.constant 0 : index
    %c0_22 = arith.constant 0 : index
    %c0_23 = arith.constant 0 : index
    %58 = vector.load %arg2[%c1, %c0_21, %c0_22, %c0_23] : memref<3x5x8x8xf32, #tpu.memory_space<vmem>>, vector<1x5x8x8xf32>
    %59 = vector.shape_cast %58 : vector<1x5x8x8xf32> to vector<5x8x8xf32>
    %c2_i32 = arith.constant 2 : i32
    %60 = tpu.dynamic_rotate %57 by %c2_i32 dim 0 : vector<32x8xf32>, i32 -> vector<32x8xf32>
    %c2_i32_24 = arith.constant 2 : i32
    %61 = vector.broadcast %c2_i32_24 : i32 to vector<32x1xi32>
    %62 = arith.cmpi sge, %1, %61 : vector<32x1xi32>
    %cst_25 = arith.constant 0.000000e+00 : f32
    %63 = vector.shape_cast %62 : vector<32x1xi1> to vector<32x1xi1>
    %64 = vector.broadcast %63 : vector<32x1xi1> to vector<32x8xi1>
    %65 = vector.broadcast %cst_25 : f32 to vector<32x8xf32>
    %66 = arith.select %64, %60, %65 : vector<32x8xi1>, vector<32x8xf32>
    %67 = vector.extract_strided_slice %59 {offsets = [0, 0, 0], sizes = [1, 8, 8], strides = [1, 1, 1]} : vector<5x8x8xf32> to vector<1x8x8xf32>
    %68 = vector.shape_cast %67 : vector<1x8x8xf32> to vector<8x8xf32>
    %cst_26 = arith.constant dense<0.000000e+00> : vector<32x8xf32>
    %69 = tpu.matmul %66, %68, %cst_26 {dimension_numbers = #tpu.dot_dimension_numbers<[1], [0], [0], [1], [0, 0, 1, 1], [], []>} : vector<32x8xf32>, vector<8x8xf32>, vector<32x8xf32> -> vector<32x8xf32>
    %c30_i32 = arith.constant 30 : i32
    %70 = tpu.dynamic_rotate %57 by %c30_i32 dim 0 : vector<32x8xf32>, i32 -> vector<32x8xf32>
    %c14_i32 = arith.constant 14 : i32
    %71 = vector.broadcast %c14_i32 : i32 to vector<32x1xi32>
    %72 = arith.cmpi slt, %1, %71 : vector<32x1xi32>
    %cst_27 = arith.constant 0.000000e+00 : f32
    %73 = vector.shape_cast %72 : vector<32x1xi1> to vector<32x1xi1>
    %74 = vector.broadcast %73 : vector<32x1xi1> to vector<32x8xi1>
    %75 = vector.broadcast %cst_27 : f32 to vector<32x8xf32>
    %76 = arith.select %74, %70, %75 : vector<32x8xi1>, vector<32x8xf32>
    %77 = vector.extract_strided_slice %59 {offsets = [1, 0, 0], sizes = [1, 8, 8], strides = [1, 1, 1]} : vector<5x8x8xf32> to vector<1x8x8xf32>
    %78 = vector.shape_cast %77 : vector<1x8x8xf32> to vector<8x8xf32>
    %cst_28 = arith.constant dense<0.000000e+00> : vector<32x8xf32>
    %79 = tpu.matmul %76, %78, %cst_28 {dimension_numbers = #tpu.dot_dimension_numbers<[1], [0], [0], [1], [0, 0, 1, 1], [], []>} : vector<32x8xf32>, vector<8x8xf32>, vector<32x8xf32> -> vector<32x8xf32>
    %80 = arith.addf %69, %79 : vector<32x8xf32>
    %c2_i32_29 = arith.constant 2 : i32
    %81 = tpu.dynamic_rotate %57 by %c2_i32_29 dim 0 : vector<32x8xf32>, i32 -> vector<32x8xf32>
    %c2_i32_30 = arith.constant 2 : i32
    %82 = vector.broadcast %c2_i32_30 : i32 to vector<32x1xi32>
    %83 = arith.cmpi sge, %1, %82 : vector<32x1xi32>
    %cst_31 = arith.constant 0.000000e+00 : f32
    %84 = vector.shape_cast %83 : vector<32x1xi1> to vector<32x1xi1>
    %85 = vector.broadcast %84 : vector<32x1xi1> to vector<32x8xi1>
    %86 = vector.broadcast %cst_31 : f32 to vector<32x8xf32>
    %87 = arith.select %85, %81, %86 : vector<32x8xi1>, vector<32x8xf32>
    %88 = vector.extract_strided_slice %59 {offsets = [2, 0, 0], sizes = [1, 8, 8], strides = [1, 1, 1]} : vector<5x8x8xf32> to vector<1x8x8xf32>
    %89 = vector.shape_cast %88 : vector<1x8x8xf32> to vector<8x8xf32>
    %cst_32 = arith.constant dense<0.000000e+00> : vector<32x8xf32>
    %90 = tpu.matmul %87, %89, %cst_32 {dimension_numbers = #tpu.dot_dimension_numbers<[1], [0], [0], [1], [0, 0, 1, 1], [], []>} : vector<32x8xf32>, vector<8x8xf32>, vector<32x8xf32> -> vector<32x8xf32>
    %91 = arith.addf %80, %90 : vector<32x8xf32>
    %c30_i32_33 = arith.constant 30 : i32
    %92 = tpu.dynamic_rotate %57 by %c30_i32_33 dim 0 : vector<32x8xf32>, i32 -> vector<32x8xf32>
    %c14_i32_34 = arith.constant 14 : i32
    %93 = vector.broadcast %c14_i32_34 : i32 to vector<32x1xi32>
    %94 = arith.cmpi slt, %1, %93 : vector<32x1xi32>
    %cst_35 = arith.constant 0.000000e+00 : f32
    %95 = vector.shape_cast %94 : vector<32x1xi1> to vector<32x1xi1>
    %96 = vector.broadcast %95 : vector<32x1xi1> to vector<32x8xi1>
    %97 = vector.broadcast %cst_35 : f32 to vector<32x8xf32>
    %98 = arith.select %96, %92, %97 : vector<32x8xi1>, vector<32x8xf32>
    %99 = vector.extract_strided_slice %59 {offsets = [3, 0, 0], sizes = [1, 8, 8], strides = [1, 1, 1]} : vector<5x8x8xf32> to vector<1x8x8xf32>
    %100 = vector.shape_cast %99 : vector<1x8x8xf32> to vector<8x8xf32>
    %cst_36 = arith.constant dense<0.000000e+00> : vector<32x8xf32>
    %101 = tpu.matmul %98, %100, %cst_36 {dimension_numbers = #tpu.dot_dimension_numbers<[1], [0], [0], [1], [0, 0, 1, 1], [], []>} : vector<32x8xf32>, vector<8x8xf32>, vector<32x8xf32> -> vector<32x8xf32>
    %102 = arith.addf %91, %101 : vector<32x8xf32>
    %103 = vector.extract_strided_slice %59 {offsets = [4, 0, 0], sizes = [1, 8, 8], strides = [1, 1, 1]} : vector<5x8x8xf32> to vector<1x8x8xf32>
    %104 = vector.shape_cast %103 : vector<1x8x8xf32> to vector<8x8xf32>
    %cst_37 = arith.constant dense<0.000000e+00> : vector<32x8xf32>
    %105 = tpu.matmul %57, %104, %cst_37 {dimension_numbers = #tpu.dot_dimension_numbers<[1], [0], [0], [1], [0, 0, 1, 1], [], []>} : vector<32x8xf32>, vector<8x8xf32>, vector<32x8xf32> -> vector<32x8xf32>
    %106 = arith.addf %102, %105 : vector<32x8xf32>
    %c1_38 = arith.constant 1 : index
    %c0_39 = arith.constant 0 : index
    %c0_40 = arith.constant 0 : index
    %107 = vector.load %arg3[%c1_38, %c0_39, %c0_40] : memref<3x1x8xf32, #tpu.memory_space<vmem>>, vector<1x1x8xf32>
    %108 = vector.shape_cast %107 : vector<1x1x8xf32> to vector<1x8xf32>
    %109 = vector.broadcast %108 : vector<1x8xf32> to vector<32x8xf32>
    %110 = arith.addf %106, %109 : vector<32x8xf32>
    %cst_41 = arith.constant 0.000000e+00 : f32
    %111 = vector.broadcast %cst_41 : f32 to vector<32x8xf32>
    %112 = arith.maximumf %110, %111 : vector<32x8xf32>
    %113 = arith.addf %112, %57 : vector<32x8xf32>
    %c2 = arith.constant 2 : index
    %c0_42 = arith.constant 0 : index
    %c0_43 = arith.constant 0 : index
    %c0_44 = arith.constant 0 : index
    %114 = vector.load %arg2[%c2, %c0_42, %c0_43, %c0_44] : memref<3x5x8x8xf32, #tpu.memory_space<vmem>>, vector<1x5x8x8xf32>
    %115 = vector.shape_cast %114 : vector<1x5x8x8xf32> to vector<5x8x8xf32>
    %c1_i32_45 = arith.constant 1 : i32
    %116 = tpu.dynamic_rotate %113 by %c1_i32_45 dim 0 : vector<32x8xf32>, i32 -> vector<32x8xf32>
    %c1_i32_46 = arith.constant 1 : i32
    %117 = vector.broadcast %c1_i32_46 : i32 to vector<32x1xi32>
    %118 = arith.cmpi sge, %1, %117 : vector<32x1xi32>
    %cst_47 = arith.constant 0.000000e+00 : f32
    %119 = vector.shape_cast %118 : vector<32x1xi1> to vector<32x1xi1>
    %120 = vector.broadcast %119 : vector<32x1xi1> to vector<32x8xi1>
    %121 = vector.broadcast %cst_47 : f32 to vector<32x8xf32>
    %122 = arith.select %120, %116, %121 : vector<32x8xi1>, vector<32x8xf32>
    %123 = vector.extract_strided_slice %115 {offsets = [0, 0, 0], sizes = [1, 8, 8], strides = [1, 1, 1]} : vector<5x8x8xf32> to vector<1x8x8xf32>
    %124 = vector.shape_cast %123 : vector<1x8x8xf32> to vector<8x8xf32>
    %cst_48 = arith.constant dense<0.000000e+00> : vector<32x8xf32>
    %125 = tpu.matmul %122, %124, %cst_48 {dimension_numbers = #tpu.dot_dimension_numbers<[1], [0], [0], [1], [0, 0, 1, 1], [], []>} : vector<32x8xf32>, vector<8x8xf32>, vector<32x8xf32> -> vector<32x8xf32>
    %c31_i32_49 = arith.constant 31 : i32
    %126 = tpu.dynamic_rotate %113 by %c31_i32_49 dim 0 : vector<32x8xf32>, i32 -> vector<32x8xf32>
    %c15_i32_50 = arith.constant 15 : i32
    %127 = vector.broadcast %c15_i32_50 : i32 to vector<32x1xi32>
    %128 = arith.cmpi slt, %1, %127 : vector<32x1xi32>
    %cst_51 = arith.constant 0.000000e+00 : f32
    %129 = vector.shape_cast %128 : vector<32x1xi1> to vector<32x1xi1>
    %130 = vector.broadcast %129 : vector<32x1xi1> to vector<32x8xi1>
    %131 = vector.broadcast %cst_51 : f32 to vector<32x8xf32>
    %132 = arith.select %130, %126, %131 : vector<32x8xi1>, vector<32x8xf32>
    %133 = vector.extract_strided_slice %115 {offsets = [1, 0, 0], sizes = [1, 8, 8], strides = [1, 1, 1]} : vector<5x8x8xf32> to vector<1x8x8xf32>
    %134 = vector.shape_cast %133 : vector<1x8x8xf32> to vector<8x8xf32>
    %cst_52 = arith.constant dense<0.000000e+00> : vector<32x8xf32>
    %135 = tpu.matmul %132, %134, %cst_52 {dimension_numbers = #tpu.dot_dimension_numbers<[1], [0], [0], [1], [0, 0, 1, 1], [], []>} : vector<32x8xf32>, vector<8x8xf32>, vector<32x8xf32> -> vector<32x8xf32>
    %136 = arith.addf %125, %135 : vector<32x8xf32>
    %c4_i32_53 = arith.constant 4 : i32
    %137 = tpu.dynamic_rotate %113 by %c4_i32_53 dim 0 : vector<32x8xf32>, i32 -> vector<32x8xf32>
    %c4_i32_54 = arith.constant 4 : i32
    %138 = vector.broadcast %c4_i32_54 : i32 to vector<32x1xi32>
    %139 = arith.cmpi sge, %1, %138 : vector<32x1xi32>
    %cst_55 = arith.constant 0.000000e+00 : f32
    %140 = vector.shape_cast %139 : vector<32x1xi1> to vector<32x1xi1>
    %141 = vector.broadcast %140 : vector<32x1xi1> to vector<32x8xi1>
    %142 = vector.broadcast %cst_55 : f32 to vector<32x8xf32>
    %143 = arith.select %141, %137, %142 : vector<32x8xi1>, vector<32x8xf32>
    %144 = vector.extract_strided_slice %115 {offsets = [2, 0, 0], sizes = [1, 8, 8], strides = [1, 1, 1]} : vector<5x8x8xf32> to vector<1x8x8xf32>
    %145 = vector.shape_cast %144 : vector<1x8x8xf32> to vector<8x8xf32>
    %cst_56 = arith.constant dense<0.000000e+00> : vector<32x8xf32>
    %146 = tpu.matmul %143, %145, %cst_56 {dimension_numbers = #tpu.dot_dimension_numbers<[1], [0], [0], [1], [0, 0, 1, 1], [], []>} : vector<32x8xf32>, vector<8x8xf32>, vector<32x8xf32> -> vector<32x8xf32>
    %147 = arith.addf %136, %146 : vector<32x8xf32>
    %c28_i32_57 = arith.constant 28 : i32
    %148 = tpu.dynamic_rotate %113 by %c28_i32_57 dim 0 : vector<32x8xf32>, i32 -> vector<32x8xf32>
    %c12_i32_58 = arith.constant 12 : i32
    %149 = vector.broadcast %c12_i32_58 : i32 to vector<32x1xi32>
    %150 = arith.cmpi slt, %1, %149 : vector<32x1xi32>
    %cst_59 = arith.constant 0.000000e+00 : f32
    %151 = vector.shape_cast %150 : vector<32x1xi1> to vector<32x1xi1>
    %152 = vector.broadcast %151 : vector<32x1xi1> to vector<32x8xi1>
    %153 = vector.broadcast %cst_59 : f32 to vector<32x8xf32>
    %154 = arith.select %152, %148, %153 : vector<32x8xi1>, vector<32x8xf32>
    %155 = vector.extract_strided_slice %115 {offsets = [3, 0, 0], sizes = [1, 8, 8], strides = [1, 1, 1]} : vector<5x8x8xf32> to vector<1x8x8xf32>
    %156 = vector.shape_cast %155 : vector<1x8x8xf32> to vector<8x8xf32>
    %cst_60 = arith.constant dense<0.000000e+00> : vector<32x8xf32>
    %157 = tpu.matmul %154, %156, %cst_60 {dimension_numbers = #tpu.dot_dimension_numbers<[1], [0], [0], [1], [0, 0, 1, 1], [], []>} : vector<32x8xf32>, vector<8x8xf32>, vector<32x8xf32> -> vector<32x8xf32>
    %158 = arith.addf %147, %157 : vector<32x8xf32>
    %159 = vector.extract_strided_slice %115 {offsets = [4, 0, 0], sizes = [1, 8, 8], strides = [1, 1, 1]} : vector<5x8x8xf32> to vector<1x8x8xf32>
    %160 = vector.shape_cast %159 : vector<1x8x8xf32> to vector<8x8xf32>
    %cst_61 = arith.constant dense<0.000000e+00> : vector<32x8xf32>
    %161 = tpu.matmul %113, %160, %cst_61 {dimension_numbers = #tpu.dot_dimension_numbers<[1], [0], [0], [1], [0, 0, 1, 1], [], []>} : vector<32x8xf32>, vector<8x8xf32>, vector<32x8xf32> -> vector<32x8xf32>
    %162 = arith.addf %158, %161 : vector<32x8xf32>
    %c2_62 = arith.constant 2 : index
    %c0_63 = arith.constant 0 : index
    %c0_64 = arith.constant 0 : index
    %163 = vector.load %arg3[%c2_62, %c0_63, %c0_64] : memref<3x1x8xf32, #tpu.memory_space<vmem>>, vector<1x1x8xf32>
    %164 = vector.shape_cast %163 : vector<1x1x8xf32> to vector<1x8xf32>
    %165 = vector.broadcast %164 : vector<1x8xf32> to vector<32x8xf32>
    %166 = arith.addf %162, %165 : vector<32x8xf32>
    %cst_65 = arith.constant 0.000000e+00 : f32
    %167 = vector.broadcast %cst_65 : f32 to vector<32x8xf32>
    %168 = arith.maximumf %166, %167 : vector<32x8xf32>
    %169 = arith.addf %168, %113 : vector<32x8xf32>
    %c0_66 = arith.constant 0 : index
    %c0_67 = arith.constant 0 : index
    %170 = vector.load %arg4[%c0_66, %c0_67] : memref<8x16xf32, #tpu.memory_space<vmem>>, vector<8x16xf32>
    %cst_68 = arith.constant dense<0.000000e+00> : vector<32x16xf32>
    %171 = tpu.matmul %169, %170, %cst_68 {dimension_numbers = #tpu.dot_dimension_numbers<[1], [0], [0], [1], [0, 0, 1, 1], [], []>} : vector<32x8xf32>, vector<8x16xf32>, vector<32x16xf32> -> vector<32x16xf32>
    %c0_69 = arith.constant 0 : index
    %c0_70 = arith.constant 0 : index
    %172 = vector.load %arg5[%c0_69, %c0_70] : memref<1x16xf32, #tpu.memory_space<vmem>>, vector<1x16xf32>
    %173 = vector.broadcast %172 : vector<1x16xf32> to vector<32x16xf32>
    %174 = arith.addf %171, %173 : vector<32x16xf32>
    %c0_71 = arith.constant 0 : index
    %c0_72 = arith.constant 0 : index
    %175 = vector.load %arg6[%c0_71, %c0_72] : memref<32x16xf32, #tpu.memory_space<vmem>>, vector<32x16xf32>
    tpu.vector_store %arg6[%c0_71, %c0_72], %174 {strides = array<i32>} : memref<32x16xf32, #tpu.memory_space<vmem>>, vector<32x16xf32>,
    return
  }
}

</mosaic_0001>

<llo_original>
// kernel: tpu_custom_call.1
$region0: #{tpu_custom_call.1}
  #allocation0 [shape = 'u32[]', space=smem, size = 0x4, offset = 0x4, fixed_abs, tag = 'smem constant byte address 0x4 - core index']
  #allocation1 [shape = 'u32[72,128]{1,0:T(1,128)}', space=vmem, size = 0x9000, scoped, tag = 'internal scratch']
  %s0 = inlined_call_operand.vmem [shape: f32[32,8], index: 0, kind: input, shape index: {}]
  %s1 = inlined_call_operand.vmem [shape: s32[32,1], index: 1, kind: input, shape index: {}]
  %s2 = inlined_call_operand.hbm [shape: f32[3,5,8,8], index: 2, kind: input, shape index: {}]
  %s3 = inlined_call_operand.vmem [shape: f32[3,1,8], index: 3, kind: input, shape index: {}]
  %s4 = inlined_call_operand.vmem [shape: f32[8,16], index: 4, kind: input, shape index: {}]
  %s5 = inlined_call_operand.vmem [shape: f32[1,16], index: 5, kind: input, shape index: {}]
  %s6 = inlined_call_operand.vmem [shape: f32[32,16], index: 6, kind: output, shape index: {}]
  %s7 = sld [smem:[#allocation0]]
  $region38: #{tpu_custom_call.1} parent=0
    _
  %s9 = ssub.s32 1, %s7
  %s10 = scalar_select 0, %s9, %s7
  $region1: #{tpu_custom_call.1} parent=0
    #allocation2 [shape = 'u8[61440]{0}', space=vmem, size = 0xf000, scoped, tag = 'input window, operand 2, single buffered']
    #allocation3 [shape = 's32[1]{0}', space=sflag, size = 0x4, scoped, tag = 'scoped memory for tpu_custom_call.1']
    %11 = vsyncpa [#allocation3], 0
    // Predicated region
    $region2: #{tpu_custom_call.1} parent=1 // pred_check
      _
    $region3: #{tpu_custom_call.1} parent=1 // pred_check_branch
      %13 = sbr.rel (0) target = $region5
    $region4: #{tpu_custom_call.1} parent=1 // pred_region
      _
    $region5: #{tpu_custom_call.1} parent=1 // pred_fallthru
      _
    // Predicated region
    $region6: #{tpu_custom_call.1} parent=1 // pred_check
      _
    $region7: #{tpu_custom_call.1} parent=1 // pred_check_branch
      %15 = sbr.rel (0) target = $region9
    $region8: #{tpu_custom_call.1} parent=1 // pred_region
      _
    $region9: #{tpu_custom_call.1} parent=1 // pred_fallthru
      _
    // Predicated region
    $region10: #{tpu_custom_call.1} parent=1 // pred_check
      _
    $region11: #{tpu_custom_call.1} parent=1 // pred_check_branch
      %17 = sbr.rel (0) target = $region13
    $region12: #{tpu_custom_call.1} parent=1 // pred_region
      %19 = vsyncadd [#allocation3], 0
      %s20 = sshll.u32 %s2, 4
      %s21 = int_to_ptr.hbm [resolvable:$true] %s20
      %s22 = sshll.u32 [#allocation2], 4
      %s23 = int_to_ptr.vmem [resolvable:$true] %s22
      %28 = dma.hbm_to_vmem [thread:$0]  %s21, 1920, %s23, [#allocation3], 128, 128, 8
    $region13: #{tpu_custom_call.1} parent=1 // pred_fallthru
      _
    // Predicated region
    $region14: #{tpu_custom_call.1} parent=1 // pred_check
      _
    $region15: #{tpu_custom_call.1} parent=1 // pred_check_branch
      %30 = sbr.rel (0) target = $region17
    $region16: #{tpu_custom_call.1} parent=1 // pred_region
      _
    $region17: #{tpu_custom_call.1} parent=1 // pred_fallthru
      _
    // Predicated region
    $region18: #{tpu_custom_call.1} parent=1 // pred_check
      _
    $region19: #{tpu_custom_call.1} parent=1 // pred_check_branch
      %32 = sbr.rel (0) target = $region21
    $region20: #{tpu_custom_call.1} parent=1 // pred_region
      _
    $region21: #{tpu_custom_call.1} parent=1 // pred_fallthru
      _
    // Predicated region
    $region22: #{tpu_custom_call.1} parent=1 // pred_check
      _
    $region23: #{tpu_custom_call.1} parent=1 // pred_check_branch
      %34 = sbr.rel (0) target = $region25
    $region24: #{tpu_custom_call.1} parent=1 // pred_region
      _
    $region25: #{tpu_custom_call.1} parent=1 // pred_fallthru
      _
    // Predicated region
    $region26: #{tpu_custom_call.1} parent=1 // pred_check
      _
    $region27: #{tpu_custom_call.1} parent=1 // pred_check_branch
      %36 = sbr.rel (0) target = $region29
    $region28: #{tpu_custom_call.1} parent=1 // pred_region
      %38 = dma.done [#allocation3], 1920
    $region29: #{tpu_custom_call.1} parent=1 // pred_fallthru
      _
    %v39 = vld [vmem:[%s0] sm:$0xff]
    %v40 = vld [vmem:[%s0 + $0x8] sm:$0xff]
    %v41 = vld [vmem:[%s0 + $0x10] sm:$0xff]
    %v42 = vld [vmem:[%s0 + $0x18] sm:$0xff]
    %v43 = vld [vmem:[%s1] sm:$0xff]
    %v44 = vld [vmem:[%s1 + $0x8] sm:$0xff]
    %v45 = vld [vmem:[%s1 + $0x10] sm:$0xff]
    %v46 = vld [vmem:[%s1 + $0x18] sm:$0xff]
    %v47 = vld [vmem:[#allocation2] sm:$0xff]
    %v48 = vld [vmem:[#allocation2 + $0x8] sm:$0xff]
    %v49 = vld [vmem:[#allocation2 + $0x10] sm:$0xff]
    %v50 = vld [vmem:[#allocation2 + $0x18] sm:$0xff]
    %v51 = vld [vmem:[#allocation2 + $0x20] sm:$0xff]
    %v52 = vrot.slane %v39, 4
    %v53 = vrot.slane %v40, 4
    %v54 = vrot.slane %v41, 4
    %v55 = vrot.slane %v42, 4
    %v56 = vlaneseq
    %v57 = vshrl.u32 %v56, 7
    %vm58 = vcmp.lt.s32.totalorder %v57, 4
    %v59 = vsel %vm58, %v54, %v55
    %v60 = vsel %vm58, %v53, %v54
    %v61 = vsel %vm58, %v52, %v53
    %v62 = vsel %vm58, %v55, %v52
    %vm63 = vcmp.ge.s32.totalorder %v43, 4
    %vm64 = vcmp.ge.s32.totalorder %v44, 4
    %vm65 = vcmp.ge.s32.totalorder %v45, 4
    %vm66 = vcmp.ge.s32.totalorder %v46, 4
    %v67 = vsel %vm63, 1, 0
    %v68 = vsel %vm64, 1, 0
    %v69 = vsel %vm65, 1, 0
    %v70 = vsel %vm66, 1, 0
    %71 = vset.pattern.permute.xlu0 0
    %72 = vperm.xlu0 %71, %v67
    %v73 = vpop.permute.xlu0 %72
    %74 = vset.pattern.permute.xlu0 0
    %75 = vperm.xlu0 %74, %v68
    %v76 = vpop.permute.xlu0 %75
    %77 = vset.pattern.permute.xlu0 0
    %78 = vperm.xlu0 %77, %v69
    %v79 = vpop.permute.xlu0 %78
    %80 = vset.pattern.permute.xlu0 0
    %81 = vperm.xlu0 %80, %v70
    %v82 = vpop.permute.xlu0 %81
    %vm83 = vcmp.eq.s32.totalorder %v73, 1
    %vm84 = vcmp.eq.s32.totalorder %v76, 1
    %vm85 = vcmp.eq.s32.totalorder %v79, 1
    %vm86 = vcmp.eq.s32.totalorder %v82, 1
    %v87 = vsel %vm83, %v62, 0.0
    %v88 = vsel %vm84, %v61, 0.0
    %v89 = vsel %vm85, %v60, 0.0
    %v90 = vsel %vm86, %v59, 0.0
    %vm91 = vcmp.lt.s32.totalorder %v43, 12
    %vm92 = vcmp.lt.s32.totalorder %v44, 12
    %vm93 = vcmp.lt.s32.totalorder %v45, 12
    %vm94 = vcmp.lt.s32.totalorder %v46, 12
    %v95 = vsel %vm91, 1, 0
    %v96 = vsel %vm92, 1, 0
    %v97 = vsel %vm93, 1, 0
    %v98 = vsel %vm94, 1, 0
    %99 = vset.pattern.permute.xlu0 0
    %100 = vperm.xlu0 %99, %v95
    %v101 = vpop.permute.xlu0 %100
    %102 = vset.pattern.permute.xlu0 0
    %103 = vperm.xlu0 %102, %v96
    %v104 = vpop.permute.xlu0 %103
    %105 = vset.pattern.permute.xlu0 0
    %106 = vperm.xlu0 %105, %v97
    %v107 = vpop.permute.xlu0 %106
    %108 = vset.pattern.permute.xlu0 0
    %109 = vperm.xlu0 %108, %v98
    %v110 = vpop.permute.xlu0 %109
    %vm111 = vcmp.eq.s32.totalorder %v101, 1
    %vm112 = vcmp.eq.s32.totalorder %v104, 1
    %vm113 = vcmp.eq.s32.totalorder %v107, 1
    %vm114 = vcmp.eq.s32.totalorder %v110, 1
    %v115 = vsel %vm111, %v61, 0.0
    %v116 = vsel %vm112, %v60, 0.0
    %v117 = vsel %vm113, %v59, 0.0
    %v118 = vsel %vm114, %v62, 0.0
    %vm119 = vcmask 64512
    %v121 = vsel %vm119, %v115, 0
    %v124 = vsel %vm119, %v116, 0
    %v127 = vsel %vm119, %v117, 0
    %v130 = vsel %vm119, %v118, 0
    %132 = vmatpush.msra.mxu0 0.0
    %133 = vmatpush.msra.mxu0 0.0
    %134 = vmatpush.msra.mxu0 0.0
    %135 = vmatpush.msra.mxu0 0.0
    %136 = vmatpush.msra.mxu0 0.0
    %137 = vmatpush.msra.mxu0 0.0
    %138 = vmatpush.msra.mxu0 0.0
    %139 = vmatpush.msra.mxu0 0.0
    %140 = vmatpush.msra.mxu0 0.0
    %141 = vmatpush.msra.mxu0 0.0
    %142 = vmatpush.msra.mxu0 0.0
    %143 = vmatpush.msra.mxu0 0.0
    %144 = vmatpush.msra.mxu0 0.0
    %145 = vmatpush.msra.mxu0 0.0
    %146 = vmatpush.msra.mxu0 0.0
    %147 = vmatpush.msra.mxu0 %v48
    %148 = vmatmul.f32.gmra.mxu0 %v121
    %v149 = vpop.f32.mrf.mxu0
    %v150 = vadd.f32 0.0, %v149
    %151 = vmatmul.f32.gmra.mxu0 %v124
    %v152 = vpop.f32.mrf.mxu0
    %v153 = vadd.f32 0.0, %v152
    %154 = vmatmul.f32.gmra.mxu0 %v127
    %v155 = vpop.f32.mrf.mxu0
    %v156 = vadd.f32 0.0, %v155
    %157 = vmatmul.f32.gmra.mxu0 %v130
    %v158 = vpop.f32.mrf.mxu0
    %v159 = vadd.f32 0.0, %v158
    %160 = vdwg.mxu0
    %v162 = vsel %vm119, %v87, 0
    %v165 = vsel %vm119, %v88, 0
    %v168 = vsel %vm119, %v89, 0
    %v171 = vsel %vm119, %v90, 0
    %173 = vmatpush.msra.mxu0 0.0
    %174 = vmatpush.msra.mxu0 0.0
    %175 = vmatpush.msra.mxu0 0.0
    %176 = vmatpush.msra.mxu0 0.0
    %177 = vmatpush.msra.mxu0 0.0
    %178 = vmatpush.msra.mxu0 0.0
    %179 = vmatpush.msra.mxu0 0.0
    %180 = vmatpush.msra.mxu0 0.0
    %181 = vmatpush.msra.mxu0 0.0
    %182 = vmatpush.msra.mxu0 0.0
    %183 = vmatpush.msra.mxu0 0.0
    %184 = vmatpush.msra.mxu0 0.0
    %185 = vmatpush.msra.mxu0 0.0
    %186 = vmatpush.msra.mxu0 0.0
    %187 = vmatpush.msra.mxu0 0.0
    %188 = vmatpush.msra.mxu0 %v47
    %189 = vmatmul.f32.gmra.mxu0 %v162
    %v190 = vpop.f32.mrf.mxu0
    %v191 = vadd.f32 %v150, %v190
    %192 = vmatmul.f32.gmra.mxu0 %v165
    %v193 = vpop.f32.mrf.mxu0
    %v194 = vadd.f32 %v153, %v193
    %195 = vmatmul.f32.gmra.mxu0 %v168
    %v196 = vpop.f32.mrf.mxu0
    %v197 = vadd.f32 %v156, %v196
    %198 = vmatmul.f32.gmra.mxu0 %v171
    %v199 = vpop.f32.mrf.mxu0
    %v200 = vadd.f32 %v159, %v199
    %201 = vdwg.mxu0
    %v202 = vrot.slane %v39, 7
    %v203 = vrot.slane %v40, 7
    %v204 = vrot.slane %v41, 7
    %v205 = vrot.slane %v42, 7
    %vm206 = vcmp.lt.s32.totalorder %v57, 1
    %v207 = vsel %vm206, %v204, %v205
    %v208 = vsel %vm206, %v203, %v204
    %v209 = vsel %vm206, %v202, %v203
    %v210 = vsel %vm206, %v205, %v202
    %vm211 = vcmp.ge.s32.totalorder %v43, 1
    %vm212 = vcmp.ge.s32.totalorder %v44, 1
    %vm213 = vcmp.ge.s32.totalorder %v45, 1
    %vm214 = vcmp.ge.s32.totalorder %v46, 1
    %v215 = vsel %vm211, 1, 0
    %v216 = vsel %vm212, 1, 0
    %v217 = vsel %vm213, 1, 0
    %v218 = vsel %vm214, 1, 0
    %219 = vset.pattern.permute.xlu0 0
    %220 = vperm.xlu0 %219, %v215
    %v221 = vpop.permute.xlu0 %220
    %222 = vset.pattern.permute.xlu0 0
    %223 = vperm.xlu0 %222, %v216
    %v224 = vpop.permute.xlu0 %223
    %225 = vset.pattern.permute.xlu0 0
    %226 = vperm.xlu0 %225, %v217
    %v227 = vpop.permute.xlu0 %226
    %228 = vset.pattern.permute.xlu0 0
    %229 = vperm.xlu0 %228, %v218
    %v230 = vpop.permute.xlu0 %229
    %vm231 = vcmp.eq.s32.totalorder %v221, 1
    %vm232 = vcmp.eq.s32.totalorder %v224, 1
    %vm233 = vcmp.eq.s32.totalorder %v227, 1
    %vm234 = vcmp.eq.s32.totalorder %v230, 1
    %v235 = vsel %vm231, %v210, 0.0
    %v236 = vsel %vm232, %v209, 0.0
    %v237 = vsel %vm233, %v208, 0.0
    %v238 = vsel %vm234, %v207, 0.0
    %v240 = vsel %vm119, %v235, 0
    %v243 = vsel %vm119, %v236, 0
    %v246 = vsel %vm119, %v237, 0
    %v249 = vsel %vm119, %v238, 0
    %251 = vmatpush.msra.mxu0 0.0
    %252 = vmatpush.msra.mxu0 0.0
    %253 = vmatpush.msra.mxu0 0.0
    %254 = vmatpush.msra.mxu0 0.0
    %255 = vmatpush.msra.mxu0 0.0
    %256 = vmatpush.msra.mxu0 0.0
    %257 = vmatpush.msra.mxu0 0.0
    %258 = vmatpush.msra.mxu0 0.0
    %259 = vmatpush.msra.mxu0 0.0
    %260 = vmatpush.msra.mxu0 0.0
    %261 = vmatpush.msra.mxu0 0.0
    %262 = vmatpush.msra.mxu0 0.0
    %263 = vmatpush.msra.mxu0 0.0
    %264 = vmatpush.msra.mxu0 0.0
    %265 = vmatpush.msra.mxu0 0.0
    %266 = vmatpush.msra.mxu0 %v49
    %267 = vmatmul.f32.gmra.mxu0 %v240
    %v268 = vpop.f32.mrf.mxu0
    %v269 = vadd.f32 0.0, %v268
    %270 = vmatmul.f32.gmra.mxu0 %v243
    %v271 = vpop.f32.mrf.mxu0
    %v272 = vadd.f32 0.0, %v271
    %273 = vmatmul.f32.gmra.mxu0 %v246
    %v274 = vpop.f32.mrf.mxu0
    %v275 = vadd.f32 0.0, %v274
    %276 = vmatmul.f32.gmra.mxu0 %v249
    %v277 = vpop.f32.mrf.mxu0
    %v278 = vadd.f32 0.0, %v277
    %279 = vdwg.mxu0
    %v280 = vadd.f32 %v191, %v269
    %v281 = vadd.f32 %v194, %v272
    %v282 = vadd.f32 %v197, %v275
    %v283 = vadd.f32 %v200, %v278
    %v284 = vrot.slane %v39, 1
    %v285 = vrot.slane %v40, 1
    %v286 = vrot.slane %v41, 1
    %v287 = vrot.slane %v42, 1
    %vm288 = vcmp.lt.s32.totalorder %v57, 7
    %v289 = vsel %vm288, %v286, %v287
    %v290 = vsel %vm288, %v285, %v286
    %v291 = vsel %vm288, %v284, %v285
    %v292 = vsel %vm288, %v287, %v284
    %vm293 = vcmp.lt.s32.totalorder %v43, 15
    %vm294 = vcmp.lt.s32.totalorder %v44, 15
    %vm295 = vcmp.lt.s32.totalorder %v45, 15
    %vm296 = vcmp.lt.s32.totalorder %v46, 15
    %v297 = vsel %vm293, 1, 0
    %v298 = vsel %vm294, 1, 0
    %v299 = vsel %vm295, 1, 0
    %v300 = vsel %vm296, 1, 0
    %301 = vset.pattern.permute.xlu0 0
    %302 = vperm.xlu0 %301, %v297
    %v303 = vpop.permute.xlu0 %302
    %304 = vset.pattern.permute.xlu0 0
    %305 = vperm.xlu0 %304, %v298
    %v306 = vpop.permute.xlu0 %305
    %307 = vset.pattern.permute.xlu0 0
    %308 = vperm.xlu0 %307, %v299
    %v309 = vpop.permute.xlu0 %308
    %310 = vset.pattern.permute.xlu0 0
    %311 = vperm.xlu0 %310, %v300
    %v312 = vpop.permute.xlu0 %311
    %vm313 = vcmp.eq.s32.totalorder %v303, 1
    %vm314 = vcmp.eq.s32.totalorder %v306, 1
    %vm315 = vcmp.eq.s32.totalorder %v309, 1
    %vm316 = vcmp.eq.s32.totalorder %v312, 1
    %v317 = vsel %vm313, %v291, 0.0
    %v318 = vsel %vm314, %v290, 0.0
    %v319 = vsel %vm315, %v289, 0.0
    %v320 = vsel %vm316, %v292, 0.0
    %v322 = vsel %vm119, %v317, 0
    %v325 = vsel %vm119, %v318, 0
    %v328 = vsel %vm119, %v319, 0
    %v331 = vsel %vm119, %v320, 0
    %333 = vmatpush.msra.mxu0 0.0
    %334 = vmatpush.msra.mxu0 0.0
    %335 = vmatpush.msra.mxu0 0.0
    %336 = vmatpush.msra.mxu0 0.0
    %337 = vmatpush.msra.mxu0 0.0
    %338 = vmatpush.msra.mxu0 0.0
    %339 = vmatpush.msra.mxu0 0.0
    %340 = vmatpush.msra.mxu0 0.0
    %341 = vmatpush.msra.mxu0 0.0
    %342 = vmatpush.msra.mxu0 0.0
    %343 = vmatpush.msra.mxu0 0.0
    %344 = vmatpush.msra.mxu0 0.0
    %345 = vmatpush.msra.mxu0 0.0
    %346 = vmatpush.msra.mxu0 0.0
    %347 = vmatpush.msra.mxu0 0.0
    %348 = vmatpush.msra.mxu0 %v50
    %349 = vmatmul.f32.gmra.mxu0 %v322
    %v350 = vpop.f32.mrf.mxu0
    %v351 = vadd.f32 0.0, %v350
    %352 = vmatmul.f32.gmra.mxu0 %v325
    %v353 = vpop.f32.mrf.mxu0
    %v354 = vadd.f32 0.0, %v353
    %355 = vmatmul.f32.gmra.mxu0 %v328
    %v356 = vpop.f32.mrf.mxu0
    %v357 = vadd.f32 0.0, %v356
    %358 = vmatmul.f32.gmra.mxu0 %v331
    %v359 = vpop.f32.mrf.mxu0
    %v360 = vadd.f32 0.0, %v359
    %361 = vdwg.mxu0
    %v362 = vadd.f32 %v280, %v351
    %v363 = vadd.f32 %v281, %v354
    %v364 = vadd.f32 %v282, %v357
    %v365 = vadd.f32 %v283, %v360
    %v367 = vsel %vm119, %v39, 0
    %v370 = vsel %vm119, %v40, 0
    %v373 = vsel %vm119, %v41, 0
    %v376 = vsel %vm119, %v42, 0
    %378 = vmatpush.msra.mxu0 0.0
    %379 = vmatpush.msra.mxu0 0.0
    %380 = vmatpush.msra.mxu0 0.0
    %381 = vmatpush.msra.mxu0 0.0
    %382 = vmatpush.msra.mxu0 0.0
    %383 = vmatpush.msra.mxu0 0.0
    %384 = vmatpush.msra.mxu0 0.0
    %385 = vmatpush.msra.mxu0 0.0
    %386 = vmatpush.msra.mxu0 0.0
    %387 = vmatpush.msra.mxu0 0.0
    %388 = vmatpush.msra.mxu0 0.0
    %389 = vmatpush.msra.mxu0 0.0
    %390 = vmatpush.msra.mxu0 0.0
    %391 = vmatpush.msra.mxu0 0.0
    %392 = vmatpush.msra.mxu0 0.0
    %393 = vmatpush.msra.mxu0 %v51
    %394 = vmatmul.f32.gmra.mxu0 %v367
    %v395 = vpop.f32.mrf.mxu0
    %v396 = vadd.f32 0.0, %v395
    %397 = vmatmul.f32.gmra.mxu0 %v370
    %v398 = vpop.f32.mrf.mxu0
    %v399 = vadd.f32 0.0, %v398
    %400 = vmatmul.f32.gmra.mxu0 %v373
    %v401 = vpop.f32.mrf.mxu0
    %v402 = vadd.f32 0.0, %v401
    %403 = vmatmul.f32.gmra.mxu0 %v376
    %v404 = vpop.f32.mrf.mxu0
    %v405 = vadd.f32 0.0, %v404
    %406 = vdwg.mxu0
    %v407 = vadd.f32 %v362, %v396
    %v408 = vadd.f32 %v363, %v399
    %v409 = vadd.f32 %v364, %v402
    %v410 = vadd.f32 %v365, %v405
    %v411 = vld [vmem:[%s3] sm:$0x1]
    %v413 = vperm.slane %v411, 0
    %v415 = vadd.f32 %v407, %v413
    %v416 = vadd.f32 %v408, %v413
    %v417 = vadd.f32 %v409, %v413
    %v418 = vadd.f32 %v410, %v413
    %v419 = vmax.f32 %v415, 0.0
    %v420 = vmax.f32 %v416, 0.0
    %v421 = vmax.f32 %v417, 0.0
    %v422 = vmax.f32 %v418, 0.0
    %v423 = vadd.f32 %v419, %v39
    %v424 = vadd.f32 %v420, %v40
    %v425 = vadd.f32 %v421, %v41
    %v426 = vadd.f32 %v422, %v42
    %s427 = scalar_lea.vmem [#allocation2], 40
    %v428 = vld [vmem:[%s427] sm:$0xff]
    %v429 = vld [vmem:[%s427 + $0x8] sm:$0xff]
    %v430 = vld [vmem:[%s427 + $0x10] sm:$0xff]
    %v431 = vld [vmem:[%s427 + $0x18] sm:$0xff]
    %v432 = vld [vmem:[%s427 + $0x20] sm:$0xff]
    %v433 = vrot.slane %v423, 6
    %v434 = vrot.slane %v424, 6
    %v435 = vrot.slane %v425, 6
    %v436 = vrot.slane %v426, 6
    %vm437 = vcmp.lt.s32.totalorder %v57, 2
    %v438 = vsel %vm437, %v435, %v436
    %v439 = vsel %vm437, %v434, %v435
    %v440 = vsel %vm437, %v433, %v434
    %v441 = vsel %vm437, %v436, %v433
    %vm442 = vcmp.ge.s32.totalorder %v43, 2
    %vm443 = vcmp.ge.s32.totalorder %v44, 2
    %vm444 = vcmp.ge.s32.totalorder %v45, 2
    %vm445 = vcmp.ge.s32.totalorder %v46, 2
    %v446 = vsel %vm442, 1, 0
    %v447 = vsel %vm443, 1, 0
    %v448 = vsel %vm444, 1, 0
    %v449 = vsel %vm445, 1, 0
    %450 = vset.pattern.permute.xlu0 0
    %451 = vperm.xlu0 %450, %v446
    %v452 = vpop.permute.xlu0 %451
    %453 = vset.pattern.permute.xlu0 0
    %454 = vperm.xlu0 %453, %v447
    %v455 = vpop.permute.xlu0 %454
    %456 = vset.pattern.permute.xlu0 0
    %457 = vperm.xlu0 %456, %v448
    %v458 = vpop.permute.xlu0 %457
    %459 = vset.pattern.permute.xlu0 0
    %460 = vperm.xlu0 %459, %v449
    %v461 = vpop.permute.xlu0 %460
    %vm462 = vcmp.eq.s32.totalorder %v452, 1
    %vm463 = vcmp.eq.s32.totalorder %v455, 1
    %vm464 = vcmp.eq.s32.totalorder %v458, 1
    %vm465 = vcmp.eq.s32.totalorder %v461, 1
    %v466 = vsel %vm462, %v441, 0.0
    %v467 = vsel %vm463, %v440, 0.0
    %v468 = vsel %vm464, %v439, 0.0
    %v469 = vsel %vm465, %v438, 0.0
    %v470 = vrot.slane %v423, 2
    %v471 = vrot.slane %v424, 2
    %v472 = vrot.slane %v425, 2
    %v473 = vrot.slane %v426, 2
    %vm474 = vcmp.lt.s32.totalorder %v57, 6
    %v475 = vsel %vm474, %v472, %v473
    %v476 = vsel %vm474, %v471, %v472
    %v477 = vsel %vm474, %v470, %v471
    %v478 = vsel %vm474, %v473, %v470
    %vm479 = vcmp.lt.s32.totalorder %v43, 14
    %vm480 = vcmp.lt.s32.totalorder %v44, 14
    %vm481 = vcmp.lt.s32.totalorder %v45, 14
    %vm482 = vcmp.lt.s32.totalorder %v46, 14
    %v483 = vsel %vm479, 1, 0
    %v484 = vsel %vm480, 1, 0
    %v485 = vsel %vm481, 1, 0
    %v486 = vsel %vm482, 1, 0
    %487 = vset.pattern.permute.xlu0 0
    %488 = vperm.xlu0 %487, %v483
    %v489 = vpop.permute.xlu0 %488
    %490 = vset.pattern.permute.xlu0 0
    %491 = vperm.xlu0 %490, %v484
    %v492 = vpop.permute.xlu0 %491
    %493 = vset.pattern.permute.xlu0 0
    %494 = vperm.xlu0 %493, %v485
    %v495 = vpop.permute.xlu0 %494
    %496 = vset.pattern.permute.xlu0 0
    %497 = vperm.xlu0 %496, %v486
    %v498 = vpop.permute.xlu0 %497
    %vm499 = vcmp.eq.s32.totalorder %v489, 1
    %vm500 = vcmp.eq.s32.totalorder %v492, 1
    %vm501 = vcmp.eq.s32.totalorder %v495, 1
    %vm502 = vcmp.eq.s32.totalorder %v498, 1
    %v503 = vsel %vm499, %v477, 0.0
    %v504 = vsel %vm500, %v476, 0.0
    %v505 = vsel %vm501, %v475, 0.0
    %v506 = vsel %vm502, %v478, 0.0
    %v508 = vsel %vm119, %v503, 0
    %v511 = vsel %vm119, %v504, 0
    %v514 = vsel %vm119, %v505, 0
    %v517 = vsel %vm119, %v506, 0
    %519 = vmatpush.msra.mxu0 0.0
    %520 = vmatpush.msra.mxu0 0.0
    %521 = vmatpush.msra.mxu0 0.0
    %522 = vmatpush.msra.mxu0 0.0
    %523 = vmatpush.msra.mxu0 0.0
    %524 = vmatpush.msra.mxu0 0.0
    %525 = vmatpush.msra.mxu0 0.0
    %526 = vmatpush.msra.mxu0 0.0
    %527 = vmatpush.msra.mxu0 0.0
    %528 = vmatpush.msra.mxu0 0.0
    %529 = vmatpush.msra.mxu0 0.0
    %530 = vmatpush.msra.mxu0 0.0
    %531 = vmatpush.msra.mxu0 0.0
    %532 = vmatpush.msra.mxu0 0.0
    %533 = vmatpush.msra.mxu0 0.0
    %534 = vmatpush.msra.mxu0 %v429
    %535 = vmatmul.f32.gmra.mxu0 %v508
    %v536 = vpop.f32.mrf.mxu0
    %v537 = vadd.f32 0.0, %v536
    %538 = vmatmul.f32.gmra.mxu0 %v511
    %v539 = vpop.f32.mrf.mxu0
    %v540 = vadd.f32 0.0, %v539
    %541 = vmatmul.f32.gmra.mxu0 %v514
    %v542 = vpop.f32.mrf.mxu0
    %v543 = vadd.f32 0.0, %v542
    %544 = vmatmul.f32.gmra.mxu0 %v517
    %v545 = vpop.f32.mrf.mxu0
    %v546 = vadd.f32 0.0, %v545
    %547 = vdwg.mxu0
    %v549 = vsel %vm119, %v466, 0
    %v552 = vsel %vm119, %v467, 0
    %v555 = vsel %vm119, %v468, 0
    %v558 = vsel %vm119, %v469, 0
    %560 = vmatpush.msra.mxu0 0.0
    %561 = vmatpush.msra.mxu0 0.0
    %562 = vmatpush.msra.mxu0 0.0
    %563 = vmatpush.msra.mxu0 0.0
    %564 = vmatpush.msra.mxu0 0.0
    %565 = vmatpush.msra.mxu0 0.0
    %566 = vmatpush.msra.mxu0 0.0
    %567 = vmatpush.msra.mxu0 0.0
    %568 = vmatpush.msra.mxu0 0.0
    %569 = vmatpush.msra.mxu0 0.0
    %570 = vmatpush.msra.mxu0 0.0
    %571 = vmatpush.msra.mxu0 0.0
    %572 = vmatpush.msra.mxu0 0.0
    %573 = vmatpush.msra.mxu0 0.0
    %574 = vmatpush.msra.mxu0 0.0
    %575 = vmatpush.msra.mxu0 %v428
    %576 = vmatmul.f32.gmra.mxu0 %v549
    %v577 = vpop.f32.mrf.mxu0
    %v578 = vadd.f32 %v537, %v577
    %579 = vmatmul.f32.gmra.mxu0 %v552
    %v580 = vpop.f32.mrf.mxu0
    %v581 = vadd.f32 %v540, %v580
    %582 = vmatmul.f32.gmra.mxu0 %v555
    %v583 = vpop.f32.mrf.mxu0
    %v584 = vadd.f32 %v543, %v583
    %585 = vmatmul.f32.gmra.mxu0 %v558
    %v586 = vpop.f32.mrf.mxu0
    %v587 = vadd.f32 %v546, %v586
    %588 = vdwg.mxu0
    %589 = vmatpush.msra.mxu0 0.0
    %590 = vmatpush.msra.mxu0 0.0
    %591 = vmatpush.msra.mxu0 0.0
    %592 = vmatpush.msra.mxu0 0.0
    %593 = vmatpush.msra.mxu0 0.0
    %594 = vmatpush.msra.mxu0 0.0
    %595 = vmatpush.msra.mxu0 0.0
    %596 = vmatpush.msra.mxu0 0.0
    %597 = vmatpush.msra.mxu0 0.0
    %598 = vmatpush.msra.mxu0 0.0
    %599 = vmatpush.msra.mxu0 0.0
    %600 = vmatpush.msra.mxu0 0.0
    %601 = vmatpush.msra.mxu0 0.0
    %602 = vmatpush.msra.mxu0 0.0
    %603 = vmatpush.msra.mxu0 0.0
    %604 = vmatpush.msra.mxu0 %v430
    %605 = vmatmul.f32.gmra.mxu0 %v549
    %v606 = vpop.f32.mrf.mxu0
    %v607 = vadd.f32 0.0, %v606
    %608 = vmatmul.f32.gmra.mxu0 %v552
    %v609 = vpop.f32.mrf.mxu0
    %v610 = vadd.f32 0.0, %v609
    %611 = vmatmul.f32.gmra.mxu0 %v555
    %v612 = vpop.f32.mrf.mxu0
    %v613 = vadd.f32 0.0, %v612
    %614 = vmatmul.f32.gmra.mxu0 %v558
    %v615 = vpop.f32.mrf.mxu0
    %v616 = vadd.f32 0.0, %v615
    %617 = vdwg.mxu0
    %v618 = vadd.f32 %v578, %v607
    %v619 = vadd.f32 %v581, %v610
    %v620 = vadd.f32 %v584, %v613
    %v621 = vadd.f32 %v587, %v616
    %622 = vmatpush.msra.mxu0 0.0
    %623 = vmatpush.msra.mxu0 0.0
    %624 = vmatpush.msra.mxu0 0.0
    %625 = vmatpush.msra.mxu0 0.0
    %626 = vmatpush.msra.mxu0 0.0
    %627 = vmatpush.msra.mxu0 0.0
    %628 = vmatpush.msra.mxu0 0.0
    %629 = vmatpush.msra.mxu0 0.0
    %630 = vmatpush.msra.mxu0 0.0
    %631 = vmatpush.msra.mxu0 0.0
    %632 = vmatpush.msra.mxu0 0.0
    %633 = vmatpush.msra.mxu0 0.0
    %634 = vmatpush.msra.mxu0 0.0
    %635 = vmatpush.msra.mxu0 0.0
    %636 = vmatpush.msra.mxu0 0.0
    %637 = vmatpush.msra.mxu0 %v431
    %638 = vmatmul.f32.gmra.mxu0 %v508
    %v639 = vpop.f32.mrf.mxu0
    %v640 = vadd.f32 0.0, %v639
    %641 = vmatmul.f32.gmra.mxu0 %v511
    %v642 = vpop.f32.mrf.mxu0
    %v643 = vadd.f32 0.0, %v642
    %644 = vmatmul.f32.gmra.mxu0 %v514
    %v645 = vpop.f32.mrf.mxu0
    %v646 = vadd.f32 0.0, %v645
    %647 = vmatmul.f32.gmra.mxu0 %v517
    %v648 = vpop.f32.mrf.mxu0
    %v649 = vadd.f32 0.0, %v648
    %650 = vdwg.mxu0
    %v651 = vadd.f32 %v618, %v640
    %v652 = vadd.f32 %v619, %v643
    %v653 = vadd.f32 %v620, %v646
    %v654 = vadd.f32 %v621, %v649
    %v656 = vsel %vm119, %v423, 0
    %v659 = vsel %vm119, %v424, 0
    %v662 = vsel %vm119, %v425, 0
    %v665 = vsel %vm119, %v426, 0
    %667 = vmatpush.msra.mxu0 0.0
    %668 = vmatpush.msra.mxu0 0.0
    %669 = vmatpush.msra.mxu0 0.0
    %670 = vmatpush.msra.mxu0 0.0
    %671 = vmatpush.msra.mxu0 0.0
    %672 = vmatpush.msra.mxu0 0.0
    %673 = vmatpush.msra.mxu0 0.0
    %674 = vmatpush.msra.mxu0 0.0
    %675 = vmatpush.msra.mxu0 0.0
    %676 = vmatpush.msra.mxu0 0.0
    %677 = vmatpush.msra.mxu0 0.0
    %678 = vmatpush.msra.mxu0 0.0
    %679 = vmatpush.msra.mxu0 0.0
    %680 = vmatpush.msra.mxu0 0.0
    %681 = vmatpush.msra.mxu0 0.0
    %682 = vmatpush.msra.mxu0 %v432
    %683 = vmatmul.f32.gmra.mxu0 %v656
    %v684 = vpop.f32.mrf.mxu0
    %v685 = vadd.f32 0.0, %v684
    %686 = vmatmul.f32.gmra.mxu0 %v659
    %v687 = vpop.f32.mrf.mxu0
    %v688 = vadd.f32 0.0, %v687
    %689 = vmatmul.f32.gmra.mxu0 %v662
    %v690 = vpop.f32.mrf.mxu0
    %v691 = vadd.f32 0.0, %v690
    %692 = vmatmul.f32.gmra.mxu0 %v665
    %v693 = vpop.f32.mrf.mxu0
    %v694 = vadd.f32 0.0, %v693
    %695 = vdwg.mxu0
    %v696 = vadd.f32 %v651, %v685
    %v697 = vadd.f32 %v652, %v688
    %v698 = vadd.f32 %v653, %v691
    %v699 = vadd.f32 %v654, %v694
    %s700 = scalar_lea.vmem %s3, 1
    %v701 = vld [vmem:[%s700] sm:$0x1]
    %v703 = vperm.slane %v701, 0
    %v705 = vadd.f32 %v696, %v703
    %v706 = vadd.f32 %v697, %v703
    %v707 = vadd.f32 %v698, %v703
    %v708 = vadd.f32 %v699, %v703
    %v709 = vmax.f32 %v705, 0.0
    %v710 = vmax.f32 %v706, 0.0
    %v711 = vmax.f32 %v707, 0.0
    %v712 = vmax.f32 %v708, 0.0
    %v713 = vadd.f32 %v709, %v423
    %v714 = vadd.f32 %v710, %v424
    %v715 = vadd.f32 %v711, %v425
    %v716 = vadd.f32 %v712, %v426
    %s717 = scalar_lea.vmem [#allocation2], 80
    %v718 = vld [vmem:[%s717] sm:$0xff]
    %v719 = vld [vmem:[%s717 + $0x8] sm:$0xff]
    %v720 = vld [vmem:[%s717 + $0x10] sm:$0xff]
    %v721 = vld [vmem:[%s717 + $0x18] sm:$0xff]
    %v722 = vld [vmem:[%s717 + $0x20] sm:$0xff]
    %v723 = vrot.slane %v713, 7
    %v724 = vrot.slane %v714, 7
    %v725 = vrot.slane %v715, 7
    %v726 = vrot.slane %v716, 7
    %v727 = vsel %vm206, %v725, %v726
    %v728 = vsel %vm206, %v724, %v725
    %v729 = vsel %vm206, %v723, %v724
    %v730 = vsel %vm206, %v726, %v723
    %v731 = vsel %vm231, %v730, 0.0
    %v732 = vsel %vm232, %v729, 0.0
    %v733 = vsel %vm233, %v728, 0.0
    %v734 = vsel %vm234, %v727, 0.0
    %v735 = vrot.slane %v713, 1
    %v736 = vrot.slane %v714, 1
    %v737 = vrot.slane %v715, 1
    %v738 = vrot.slane %v716, 1
    %v739 = vsel %vm288, %v737, %v738
    %v740 = vsel %vm288, %v736, %v737
    %v741 = vsel %vm288, %v735, %v736
    %v742 = vsel %vm288, %v738, %v735
    %v743 = vsel %vm313, %v741, 0.0
    %v744 = vsel %vm314, %v740, 0.0
    %v745 = vsel %vm315, %v739, 0.0
    %v746 = vsel %vm316, %v742, 0.0
    %v748 = vsel %vm119, %v743, 0
    %v751 = vsel %vm119, %v744, 0
    %v754 = vsel %vm119, %v745, 0
    %v757 = vsel %vm119, %v746, 0
    %759 = vmatpush.msra.mxu0 0.0
    %760 = vmatpush.msra.mxu0 0.0
    %761 = vmatpush.msra.mxu0 0.0
    %762 = vmatpush.msra.mxu0 0.0
    %763 = vmatpush.msra.mxu0 0.0
    %764 = vmatpush.msra.mxu0 0.0
    %765 = vmatpush.msra.mxu0 0.0
    %766 = vmatpush.msra.mxu0 0.0
    %767 = vmatpush.msra.mxu0 0.0
    %768 = vmatpush.msra.mxu0 0.0
    %769 = vmatpush.msra.mxu0 0.0
    %770 = vmatpush.msra.mxu0 0.0
    %771 = vmatpush.msra.mxu0 0.0
    %772 = vmatpush.msra.mxu0 0.0
    %773 = vmatpush.msra.mxu0 0.0
    %774 = vmatpush.msra.mxu0 %v719
    %775 = vmatmul.f32.gmra.mxu0 %v748
    %v776 = vpop.f32.mrf.mxu0
    %v777 = vadd.f32 0.0, %v776
    %778 = vmatmul.f32.gmra.mxu0 %v751
    %v779 = vpop.f32.mrf.mxu0
    %v780 = vadd.f32 0.0, %v779
    %781 = vmatmul.f32.gmra.mxu0 %v754
    %v782 = vpop.f32.mrf.mxu0
    %v783 = vadd.f32 0.0, %v782
    %784 = vmatmul.f32.gmra.mxu0 %v757
    %v785 = vpop.f32.mrf.mxu0
    %v786 = vadd.f32 0.0, %v785
    %787 = vdwg.mxu0
    %v789 = vsel %vm119, %v731, 0
    %v792 = vsel %vm119, %v732, 0
    %v795 = vsel %vm119, %v733, 0
    %v798 = vsel %vm119, %v734, 0
    %800 = vmatpush.msra.mxu0 0.0
    %801 = vmatpush.msra.mxu0 0.0
    %802 = vmatpush.msra.mxu0 0.0
    %803 = vmatpush.msra.mxu0 0.0
    %804 = vmatpush.msra.mxu0 0.0
    %805 = vmatpush.msra.mxu0 0.0
    %806 = vmatpush.msra.mxu0 0.0
    %807 = vmatpush.msra.mxu0 0.0
    %808 = vmatpush.msra.mxu0 0.0
    %809 = vmatpush.msra.mxu0 0.0
    %810 = vmatpush.msra.mxu0 0.0
    %811 = vmatpush.msra.mxu0 0.0
    %812 = vmatpush.msra.mxu0 0.0
    %813 = vmatpush.msra.mxu0 0.0
    %814 = vmatpush.msra.mxu0 0.0
    %815 = vmatpush.msra.mxu0 %v718
    %816 = vmatmul.f32.gmra.mxu0 %v789
    %v817 = vpop.f32.mrf.mxu0
    %v818 = vadd.f32 %v777, %v817
    %819 = vmatmul.f32.gmra.mxu0 %v792
    %v820 = vpop.f32.mrf.mxu0
    %v821 = vadd.f32 %v780, %v820
    %822 = vmatmul.f32.gmra.mxu0 %v795
    %v823 = vpop.f32.mrf.mxu0
    %v824 = vadd.f32 %v783, %v823
    %825 = vmatmul.f32.gmra.mxu0 %v798
    %v826 = vpop.f32.mrf.mxu0
    %v827 = vadd.f32 %v786, %v826
    %828 = vdwg.mxu0
    %v829 = vrot.slane %v713, 4
    %v830 = vrot.slane %v714, 4
    %v831 = vrot.slane %v715, 4
    %v832 = vrot.slane %v716, 4
    %v833 = vsel %vm58, %v831, %v832
    %v834 = vsel %vm58, %v830, %v831
    %v835 = vsel %vm58, %v829, %v830
    %v836 = vsel %vm58, %v832, %v829
    %v837 = vsel %vm83, %v836, 0.0
    %v838 = vsel %vm84, %v835, 0.0
    %v839 = vsel %vm85, %v834, 0.0
    %v840 = vsel %vm86, %v833, 0.0
    %v842 = vsel %vm119, %v837, 0
    %v845 = vsel %vm119, %v838, 0
    %v848 = vsel %vm119, %v839, 0
    %v851 = vsel %vm119, %v840, 0
    %853 = vmatpush.msra.mxu0 0.0
    %854 = vmatpush.msra.mxu0 0.0
    %855 = vmatpush.msra.mxu0 0.0
    %856 = vmatpush.msra.mxu0 0.0
    %857 = vmatpush.msra.mxu0 0.0
    %858 = vmatpush.msra.mxu0 0.0
    %859 = vmatpush.msra.mxu0 0.0
    %860 = vmatpush.msra.mxu0 0.0
    %861 = vmatpush.msra.mxu0 0.0
    %862 = vmatpush.msra.mxu0 0.0
    %863 = vmatpush.msra.mxu0 0.0
    %864 = vmatpush.msra.mxu0 0.0
    %865 = vmatpush.msra.mxu0 0.0
    %866 = vmatpush.msra.mxu0 0.0
    %867 = vmatpush.msra.mxu0 0.0
    %868 = vmatpush.msra.mxu0 %v720
    %869 = vmatmul.f32.gmra.mxu0 %v842
    %v870 = vpop.f32.mrf.mxu0
    %v871 = vadd.f32 0.0, %v870
    %872 = vmatmul.f32.gmra.mxu0 %v845
    %v873 = vpop.f32.mrf.mxu0
    %v874 = vadd.f32 0.0, %v873
    %875 = vmatmul.f32.gmra.mxu0 %v848
    %v876 = vpop.f32.mrf.mxu0
    %v877 = vadd.f32 0.0, %v876
    %878 = vmatmul.f32.gmra.mxu0 %v851
    %v879 = vpop.f32.mrf.mxu0
    %v880 = vadd.f32 0.0, %v879
    %881 = vdwg.mxu0
    %v882 = vadd.f32 %v818, %v871
    %v883 = vadd.f32 %v821, %v874
    %v884 = vadd.f32 %v824, %v877
    %v885 = vadd.f32 %v827, %v880
    %v886 = vsel %vm111, %v835, 0.0
    %v887 = vsel %vm112, %v834, 0.0
    %v888 = vsel %vm113, %v833, 0.0
    %v889 = vsel %vm114, %v836, 0.0
    %v891 = vsel %vm119, %v886, 0
    %v894 = vsel %vm119, %v887, 0
    %v897 = vsel %vm119, %v888, 0
    %v900 = vsel %vm119, %v889, 0
    %902 = vmatpush.msra.mxu0 0.0
    %903 = vmatpush.msra.mxu0 0.0
    %904 = vmatpush.msra.mxu0 0.0
    %905 = vmatpush.msra.mxu0 0.0
    %906 = vmatpush.msra.mxu0 0.0
    %907 = vmatpush.msra.mxu0 0.0
    %908 = vmatpush.msra.mxu0 0.0
    %909 = vmatpush.msra.mxu0 0.0
    %910 = vmatpush.msra.mxu0 0.0
    %911 = vmatpush.msra.mxu0 0.0
    %912 = vmatpush.msra.mxu0 0.0
    %913 = vmatpush.msra.mxu0 0.0
    %914 = vmatpush.msra.mxu0 0.0
    %915 = vmatpush.msra.mxu0 0.0
    %916 = vmatpush.msra.mxu0 0.0
    %917 = vmatpush.msra.mxu0 %v721
    %918 = vmatmul.f32.gmra.mxu0 %v891
    %v919 = vpop.f32.mrf.mxu0
    %v920 = vadd.f32 0.0, %v919
    %921 = vmatmul.f32.gmra.mxu0 %v894
    %v922 = vpop.f32.mrf.mxu0
    %v923 = vadd.f32 0.0, %v922
    %924 = vmatmul.f32.gmra.mxu0 %v897
    %v925 = vpop.f32.mrf.mxu0
    %v926 = vadd.f32 0.0, %v925
    %927 = vmatmul.f32.gmra.mxu0 %v900
    %v928 = vpop.f32.mrf.mxu0
    %v929 = vadd.f32 0.0, %v928
    %930 = vdwg.mxu0
    %v931 = vadd.f32 %v882, %v920
    %v932 = vadd.f32 %v883, %v923
    %v933 = vadd.f32 %v884, %v926
    %v934 = vadd.f32 %v885, %v929
    %v936 = vsel %vm119, %v713, 0
    %v939 = vsel %vm119, %v714, 0
    %v942 = vsel %vm119, %v715, 0
    %v945 = vsel %vm119, %v716, 0
    %947 = vmatpush.msra.mxu0 0.0
    %948 = vmatpush.msra.mxu0 0.0
    %949 = vmatpush.msra.mxu0 0.0
    %950 = vmatpush.msra.mxu0 0.0
    %951 = vmatpush.msra.mxu0 0.0
    %952 = vmatpush.msra.mxu0 0.0
    %953 = vmatpush.msra.mxu0 0.0
    %954 = vmatpush.msra.mxu0 0.0
    %955 = vmatpush.msra.mxu0 0.0
    %956 = vmatpush.msra.mxu0 0.0
    %957 = vmatpush.msra.mxu0 0.0
    %958 = vmatpush.msra.mxu0 0.0
    %959 = vmatpush.msra.mxu0 0.0
    %960 = vmatpush.msra.mxu0 0.0
    %961 = vmatpush.msra.mxu0 0.0
    %962 = vmatpush.msra.mxu0 %v722
    %963 = vmatmul.f32.gmra.mxu0 %v936
    %v964 = vpop.f32.mrf.mxu0
    %v965 = vadd.f32 0.0, %v964
    %966 = vmatmul.f32.gmra.mxu0 %v939
    %v967 = vpop.f32.mrf.mxu0
    %v968 = vadd.f32 0.0, %v967
    %969 = vmatmul.f32.gmra.mxu0 %v942
    %v970 = vpop.f32.mrf.mxu0
    %v971 = vadd.f32 0.0, %v970
    %972 = vmatmul.f32.gmra.mxu0 %v945
    %v973 = vpop.f32.mrf.mxu0
    %v974 = vadd.f32 0.0, %v973
    %975 = vdwg.mxu0
    %v976 = vadd.f32 %v931, %v965
    %v977 = vadd.f32 %v932, %v968
    %v978 = vadd.f32 %v933, %v971
    %v979 = vadd.f32 %v934, %v974
    %s980 = scalar_lea.vmem %s3, 2
    %v981 = vld [vmem:[%s980] sm:$0x1]
    %v983 = vperm.slane %v981, 0
    %v985 = vadd.f32 %v976, %v983
    %v986 = vadd.f32 %v977, %v983
    %v987 = vadd.f32 %v978, %v983
    %v988 = vadd.f32 %v979, %v983
    %v989 = vmax.f32 %v985, 0.0
    %v990 = vmax.f32 %v986, 0.0
    %v991 = vmax.f32 %v987, 0.0
    %v992 = vmax.f32 %v988, 0.0
    %v993 = vadd.f32 %v989, %v713
    %v994 = vadd.f32 %v990, %v714
    %v995 = vadd.f32 %v991, %v715
    %v996 = vadd.f32 %v992, %v716
    %v997 = vld [vmem:[%s4] sm:$0xff]
    %v998 = vld [vmem:[%s5] sm:$0x1]
    %v1000 = vperm.slane %v998, 0
    %v1003 = vsel %vm119, %v993, 0
    %v1006 = vsel %vm119, %v994, 0
    %v1009 = vsel %vm119, %v995, 0
    %v1012 = vsel %vm119, %v996, 0
    %1014 = vmatpush.msra.mxu0 0.0
    %1015 = vmatpush.msra.mxu0 0.0
    %1016 = vmatpush.msra.mxu0 0.0
    %1017 = vmatpush.msra.mxu0 0.0
    %1018 = vmatpush.msra.mxu0 0.0
    %1019 = vmatpush.msra.mxu0 0.0
    %1020 = vmatpush.msra.mxu0 0.0
    %1021 = vmatpush.msra.mxu0 0.0
    %1022 = vmatpush.msra.mxu0 0.0
    %1023 = vmatpush.msra.mxu0 0.0
    %1024 = vmatpush.msra.mxu0 0.0
    %1025 = vmatpush.msra.mxu0 0.0
    %1026 = vmatpush.msra.mxu0 0.0
    %1027 = vmatpush.msra.mxu0 0.0
    %1028 = vmatpush.msra.mxu0 0.0
    %1029 = vmatpush.msra.mxu0 %v997
    %1030 = vmatmul.f32.gmra.mxu0 %v1003
    %v1031 = vpop.f32.mrf.mxu0
    %v1032 = vadd.f32 %v1000, %v1031
    %1033 = vmatmul.f32.gmra.mxu0 %v1006
    %v1034 = vpop.f32.mrf.mxu0
    %v1035 = vadd.f32 %v1000, %v1034
    %1036 = vmatmul.f32.gmra.mxu0 %v1009
    %v1037 = vpop.f32.mrf.mxu0
    %v1038 = vadd.f32 %v1000, %v1037
    %1039 = vmatmul.f32.gmra.mxu0 %v1012
    %v1040 = vpop.f32.mrf.mxu0
    %v1041 = vadd.f32 %v1000, %v1040
    %1042 = vdwg.mxu0
    %vm1043 = vcmask 130048
    %1044 = vst.msk [vmem:[%s6] sm:$0xff] %vm1043, %v1032
    %1045 = vst.msk [vmem:[%s6 + $0x8] sm:$0xff] %vm1043, %v1035
    %1046 = vst.msk [vmem:[%s6 + $0x10] sm:$0xff] %vm1043, %v1038
    %1047 = vst.msk [vmem:[%s6 + $0x18] sm:$0xff] %vm1043, %v1041
    // Predicated region
    $region30: #{tpu_custom_call.1} parent=1 // pred_check
      _
    $region31: #{tpu_custom_call.1} parent=1 // pred_check_branch
      %1049 = sbr.rel (0) target = $region33
    $region32: #{tpu_custom_call.1} parent=1 // pred_region
      _
    $region33: #{tpu_custom_call.1} parent=1 // pred_fallthru
      _
    // Predicated region
    $region34: #{tpu_custom_call.1} parent=1 // pred_check
      _
    $region35: #{tpu_custom_call.1} parent=1 // pred_check_branch
      %1051 = sbr.rel (0) target = $region37
    $region36: #{tpu_custom_call.1} parent=1 // pred_region
      _
    $region37: #{tpu_custom_call.1} parent=1 // pred_fallthru
      _
    %1052 = vsyncpa [#allocation3], 1

</llo_original>
